<compile_context>
chip_gen: v7x
topology: tpu7x:2x2x1
jax: 0.10.0
libtpu: 0.0.40
codegen_flags: <defaults>
</compile_context>

<pallas_src>
import functools
import math

import jax
import jax.numpy as jnp
from jax import lax
from jax.experimental import pallas as pl
from jax.experimental.pallas import tpu as pltpu

_SALT1 = 0x243F6A88   # distinct per-dropout-layer stream salts
_SALT2 = 0x2B7E1516


def _std_normal_cdf(t):
    """Phi(t) at trace time (python float)."""
    return 0.5 * (1.0 + math.erf(t / math.sqrt(2.0)))


def _keep_mask(shape, seed_u32, row_off, salt, threshold_i32):
    """Deterministic per-element keep mask from a counter-based integer hash.

    Depends only on (global row, column, seed, salt), so it is invariant to the
    row tiling: the in-kernel mask equals the whole-array reference mask.
    Uses only jnp/lax ops (lowers under Mosaic and under interpret mode).
    """
    r = (lax.broadcasted_iota(jnp.int32, shape, 0) + row_off).astype(jnp.uint32)
    c = lax.broadcasted_iota(jnp.int32, shape, 1).astype(jnp.uint32)
    x = r * jnp.uint32(0x9E3779B9) + c * jnp.uint32(0x85EBCA6B)
    x = x + seed_u32 + jnp.uint32(salt)
    # murmur3-style finalizer mix
    x = x ^ (x >> 16)
    x = x * jnp.uint32(0x7FEB352D)
    x = x ^ (x >> 15)
    x = x * jnp.uint32(0x846CA68B)
    x = x ^ (x >> 16)
    bits31 = (x >> 1).astype(jnp.int32)            # 31 uniform bits, non-negative
    return bits31 < jnp.int32(threshold_i32)


def _dropout(h, theta, seed_u32, row_off, salt):
    """From-scratch dropout of the reference: mask = (N(0,1) > theta), y = mask * h.
    The reference's 1/(1-theta) scale is folded into the NEXT layer's weights by
    the wrapper. Keep probability P(N(0,1) > theta) is preserved exactly; the
    per-element bits differ from torch's RNG."""
    if theta == 0.0:
        return h
    if theta == 1.0:
        return jnp.zeros_like(h)   # reference would divide by zero here; intentional
    keep_prob = 1.0 - _std_normal_cdf(theta)                    # trace-time constant
    threshold = min(int(keep_prob * float(1 << 31)), (1 << 31) - 1)
    keep = _keep_mask(h.shape, seed_u32, row_off, salt, threshold)
    return jnp.where(keep, h, 0.0)


def _mlp_dropout_kernel(theta1, theta2, tm,
                        seed_ref,
                        x_ref, w1_ref, b1_ref, w2_ref, b2_ref, w3_ref, b3_ref,
                        o_ref):
    seed_u32 = seed_ref[0].astype(jnp.uint32)
    row_off = pl.program_id(0) * tm                 # global row offset of this tile

    # lin1 + ReLU + dropout1 (scale folded into w2)
    h = jnp.dot(x_ref[...], w1_ref[...], preferred_element_type=jnp.float32) + b1_ref[...]
    h = jnp.maximum(h, 0.0)
    h = _dropout(h, theta1, seed_u32, row_off, _SALT1)

    # lin2 + ReLU + dropout2 (scale folded into w3)
    h = jnp.dot(h, w2_ref[...], preferred_element_type=jnp.float32) + b2_ref[...]
    h = jnp.maximum(h, 0.0)
    h = _dropout(h, theta2, seed_u32, row_off, _SALT2)

    # lin3 (no activation); output stored at its true width (lane-masked but 4x fewer bytes)
    o_ref[...] = jnp.dot(h, w3_ref[...], preferred_element_type=jnp.float32) + b3_ref[...]


def _round_up(n, m):
    return ((n + m - 1) // m) * m


def _pick_tm(n_rows, target=1024):
    rows8 = _round_up(n_rows, 8)
    tm = min(target, rows8)
    # v7x megacore: ensure the "parallel" row axis has >= 2 tiles when there is
    # enough work to split across the two TensorCores.
    if rows8 >= 16 and pl.cdiv(rows8, tm) < 2:
        tm = _round_up(rows8 // 2, 8)
    return max(tm, 8)


def _fold_params(params, theta1, theta2):
    """f32 weights with the dropout scales 1/(1-theta) folded into w2 / w3."""
    w1, b1, w2, b2, w3, b3 = params
    s1 = 1.0 / (1.0 - theta1) if 0.0 < theta1 < 1.0 else 1.0
    s2 = 1.0 / (1.0 - theta2) if 0.0 < theta2 < 1.0 else 1.0
    return (w1.astype(jnp.float32), b1.astype(jnp.float32),
            (w2 * s1).astype(jnp.float32), b2.astype(jnp.float32),
            (w3 * s2).astype(jnp.float32), b3.astype(jnp.float32))


# TODO(synk): no train/eval flag — dropout is always applied (reference runs train=True).
def net_forward(x, params, theta1, theta2, input_size, seed=0, tm=None):
    assert 0.0 <= theta1 <= 1.0 and 0.0 <= theta2 <= 1.0
    w1f, b1f, w2f, b2f, w3f, b3f = _fold_params(params, theta1, theta2)
    hidden1 = w1f.shape[1]
    hidden2 = w2f.shape[1]
    out_size = w3f.shape[1]

    x2d = x.reshape(-1, input_size).astype(jnp.float32)   # no pad, no extra HBM pass
    n_rows = x2d.shape[0]

    if tm is None:
        tm = _pick_tm(n_rows)
    n_tiles = pl.cdiv(n_rows, tm)

    seed_arr = jnp.asarray([seed], dtype=jnp.int32)
    kernel = functools.partial(_mlp_dropout_kernel, float(theta1), float(theta2), tm)

    rows = lambda i, seed_ref: (i, 0)        # tiled along the row axis
    resident = lambda i, seed_ref: (0, 0)    # same block every step -> stays in VMEM

    return pl.pallas_call(
        kernel,
        out_shape=jax.ShapeDtypeStruct((n_rows, out_size), jnp.float32),
        grid_spec=pltpu.PrefetchScalarGridSpec(
            num_scalar_prefetch=1,
            grid=(n_tiles,),
            in_specs=[
                pl.BlockSpec((tm, input_size), rows),
                pl.BlockSpec((input_size, hidden1), resident),
                pl.BlockSpec((1, hidden1), resident),
                pl.BlockSpec((hidden1, hidden2), resident),
                pl.BlockSpec((1, hidden2), resident),
                pl.BlockSpec((hidden2, out_size), resident),
                pl.BlockSpec((1, out_size), resident),
            ],
            out_specs=pl.BlockSpec((tm, out_size), rows),
        ),
        compiler_params=pltpu.CompilerParams(
            dimension_semantics=("parallel",),   # shard row tiles across TCs (v7x)
        ),
    )(seed_arr, x2d, w1f, b1f, w2f, b2f, w3f, b3f)


def net_reference(x, params, theta1, theta2, input_size, seed=0):
    """Pure-JAX reference using the identical hash-based dropout mask."""
    w1f, b1f, w2f, b2f, w3f, b3f = _fold_params(params, theta1, theta2)
    x2d = x.reshape(-1, input_size).astype(jnp.float32)
    seed_u32 = jnp.uint32(seed)
    h = jnp.maximum(x2d @ w1f + b1f, 0.0)
    h = _dropout(h, float(theta1), seed_u32, 0, _SALT1)
    h = jnp.maximum(h @ w2f + b2f, 0.0)
    h = _dropout(h, float(theta2), seed_u32, 0, _SALT2)
    return h @ w3f + b3f


def init_params(key, input_size, hidden1, hidden2, output_size):
    """Deterministic nn.Linear-style init: U(-1/sqrt(fan_in), 1/sqrt(fan_in))."""
    ks = jax.random.split(key, 6)

    def lin(kw, kb, fan_in, fan_out):
        bound = 1.0 / math.sqrt(fan_in)
        w = jax.random.uniform(kw, (fan_in, fan_out), jnp.float32, -bound, bound)
        b = jax.random.uniform(kb, (1, fan_out), jnp.float32, -bound, bound)
        return w, b

    w1, b1 = lin(ks[0], ks[1], input_size, hidden1)
    w2, b2 = lin(ks[2], ks[3], hidden1, hidden2)
    w3, b3 = lin(ks[4], ks[5], hidden2, output_size)
    return (w1, b1, w2, b2, w3, b3)


if __name__ == "__main__":
    input_size, hidden1, hidden2, output_size = 64, 128, 64, 32
    theta1, theta2 = 0.2, 0.5

    key = jax.random.PRNGKey(0)
    k_param, k_x1, k_x2 = jax.random.split(key, 3)
    params = init_params(k_param, input_size, hidden1, hidden2, output_size)

    # Small demo shape consistent with the module: (2, 4, 16) -> reshape(-1, 64) -> 2 rows.
    x = jax.random.normal(k_x1, (2, 4, 16), dtype=jnp.float32)
    out = net_forward(x, params, theta1, theta2, input_size, seed=0)
    jax.block_until_ready(out)
    assert out.shape == (x.size // input_size, output_size)
    assert out.dtype == jnp.float32
    assert bool(jnp.all(jnp.isfinite(out)))
    ref = net_reference(x, params, theta1, theta2, input_size, seed=0)
    assert bool(jnp.allclose(out, ref, rtol=1e-1, atol=1e-1))

    # Second case exercising multiple row tiles and the partial last tile (27 rows).
    x_big = jax.random.normal(k_x2, (3, 9, 64), dtype=jnp.float32)
    out_big = net_forward(x_big, params, theta1, theta2, input_size, seed=7)
    jax.block_until_ready(out_big)
    assert out_big.shape == (27, output_size)
    assert bool(jnp.all(jnp.isfinite(out_big)))
    ref_big = net_reference(x_big, params, theta1, theta2, input_size, seed=7)
    assert bool(jnp.allclose(out_big, ref_big, rtol=1e-1, atol=1e-1))

    print("KERNEL_OK")
</pallas_src>

<mosaic_0001>
module attributes {stable_mosaic.version = 11 : i64} {
  func.func @_mlp_dropout_kernel(%arg0: i32, %arg1: memref<1xi32, #tpu.memory_space<smem>>, %arg2: memref<8x64xf32, #tpu.memory_space<vmem>>, %arg3: memref<64x128xf32, #tpu.memory_space<vmem>>, %arg4: memref<1x128xf32, #tpu.memory_space<vmem>>, %arg5: memref<128x64xf32, #tpu.memory_space<vmem>>, %arg6: memref<1x64xf32, #tpu.memory_space<vmem>>, %arg7: memref<64x32xf32, #tpu.memory_space<vmem>>, %arg8: memref<1x32xf32, #tpu.memory_space<vmem>>, %arg9: memref<8x32xf32, #tpu.memory_space<vmem>>) attributes {dimension_semantics = [#tpu.dimension_semantics<parallel>], iteration_bounds = array<i64: 1>, scalar_prefetch = 1 : i64, scratch_operands = 0 : i64, tpu.core_type = #tpu.core_type<tc>, window_params = [{transform_indices = @transform_0, window_bounds = array<i64: 8, 64>}, {pipeline_mode = #tpu.pipeline_mode<synchronous>, transform_indices = @transform_1, window_bounds = array<i64: 64, 128>}, {pipeline_mode = #tpu.pipeline_mode<synchronous>, transform_indices = @transform_2, window_bounds = array<i64: 1, 128>}, {pipeline_mode = #tpu.pipeline_mode<synchronous>, transform_indices = @transform_3, window_bounds = array<i64: 128, 64>}, {pipeline_mode = #tpu.pipeline_mode<synchronous>, transform_indices = @transform_4, window_bounds = array<i64: 1, 64>}, {pipeline_mode = #tpu.pipeline_mode<synchronous>, transform_indices = @transform_5, window_bounds = array<i64: 64, 32>}, {pipeline_mode = #tpu.pipeline_mode<synchronous>, transform_indices = @transform_6, window_bounds = array<i64: 1, 32>}, {transform_indices = @transform_7, window_bounds = array<i64: 8, 32>}]} {
    %c0 = arith.constant 0 : index
    %0 = memref.load %arg1[%c0] : memref<1xi32, #tpu.memory_space<smem>>
    %c8_i32 = arith.constant 8 : i32
    %1 = arith.muli %arg0, %c8_i32 : i32
    %c0_0 = arith.constant 0 : index
    %c0_1 = arith.constant 0 : index
    %2 = vector.load %arg2[%c0_0, %c0_1] : memref<8x64xf32, #tpu.memory_space<vmem>>, vector<8x64xf32>
    %c0_2 = arith.constant 0 : index
    %c0_3 = arith.constant 0 : index
    %3 = vector.load %arg3[%c0_2, %c0_3] : memref<64x128xf32, #tpu.memory_space<vmem>>, vector<64x128xf32>
    %cst = arith.constant dense<0.000000e+00> : vector<8x128xf32>
    %4 = tpu.matmul %2, %3, %cst {dimension_numbers = #tpu.dot_dimension_numbers<[1], [0], [0], [1], [0, 0, 1, 1], [], []>} : vector<8x64xf32>, vector<64x128xf32>, vector<8x128xf32> -> vector<8x128xf32>
    %c0_4 = arith.constant 0 : index
    %c0_5 = arith.constant 0 : index
    %5 = vector.load %arg4[%c0_4, %c0_5] : memref<1x128xf32, #tpu.memory_space<vmem>>, vector<1x128xf32>
    %6 = vector.broadcast %5 : vector<1x128xf32> to vector<8x128xf32>
    %7 = arith.addf %4, %6 : vector<8x128xf32>
    %cst_6 = arith.constant 0.000000e+00 : f32
    %8 = vector.broadcast %cst_6 : f32 to vector<8x128xf32>
    %9 = arith.maximumf %7, %8 : vector<8x128xf32>
    %10 = tpu.iota {dimensions = array<i32: 0>} : vector<8x128xi32>
    %11 = vector.broadcast %1 : i32 to vector<8x128xi32>
    %12 = arith.addi %10, %11 : vector<8x128xi32>
    %13 = tpu.iota {dimensions = array<i32: 1>} : vector<8x128xi32>
    %c-1640531527_i32 = arith.constant -1640531527 : i32
    %14 = vector.broadcast %c-1640531527_i32 : i32 to vector<8x128xi32>
    %15 = arith.muli %12, %14 : vector<8x128xi32>
    %c-2048144789_i32 = arith.constant -2048144789 : i32
    %16 = vector.broadcast %c-2048144789_i32 : i32 to vector<8x128xi32>
    %17 = arith.muli %13, %16 : vector<8x128xi32>
    %18 = arith.addi %15, %17 : vector<8x128xi32>
    %19 = vector.broadcast %0 : i32 to vector<8x128xi32>
    %20 = arith.addi %18, %19 : vector<8x128xi32>
    %c608135816_i32 = arith.constant 608135816 : i32
    %21 = vector.broadcast %c608135816_i32 : i32 to vector<8x128xi32>
    %22 = arith.addi %20, %21 : vector<8x128xi32>
    %c16_i32 = arith.constant 16 : i32
    %23 = vector.broadcast %c16_i32 : i32 to vector<8x128xi32>
    %24 = arith.shrui %22, %23 : vector<8x128xi32>
    %25 = arith.xori %22, %24 : vector<8x128xi32>
    %c2146121005_i32 = arith.constant 2146121005 : i32
    %26 = vector.broadcast %c2146121005_i32 : i32 to vector<8x128xi32>
    %27 = arith.muli %25, %26 : vector<8x128xi32>
    %c15_i32 = arith.constant 15 : i32
    %28 = vector.broadcast %c15_i32 : i32 to vector<8x128xi32>
    %29 = arith.shrui %27, %28 : vector<8x128xi32>
    %30 = arith.xori %27, %29 : vector<8x128xi32>
    %c-2073254261_i32 = arith.constant -2073254261 : i32
    %31 = vector.broadcast %c-2073254261_i32 : i32 to vector<8x128xi32>
    %32 = arith.muli %30, %31 : vector<8x128xi32>
    %c16_i32_7 = arith.constant 16 : i32
    %33 = vector.broadcast %c16_i32_7 : i32 to vector<8x128xi32>
    %34 = arith.shrui %32, %33 : vector<8x128xi32>
    %35 = arith.xori %32, %34 : vector<8x128xi32>
    %c1_i32 = arith.constant 1 : i32
    %36 = vector.broadcast %c1_i32 : i32 to vector<8x128xi32>
    %37 = arith.shrui %35, %36 : vector<8x128xi32>
    %c903532894_i32 = arith.constant 903532894 : i32
    %38 = vector.broadcast %c903532894_i32 : i32 to vector<8x128xi32>
    %39 = arith.cmpi slt, %37, %38 : vector<8x128xi32>
    %cst_8 = arith.constant 0.000000e+00 : f32
    %40 = vector.broadcast %cst_8 : f32 to vector<8x128xf32>
    %41 = arith.select %39, %9, %40 : vector<8x128xi1>, vector<8x128xf32>
    %c0_9 = arith.constant 0 : index
    %c0_10 = arith.constant 0 : index
    %42 = vector.load %arg5[%c0_9, %c0_10] : memref<128x64xf32, #tpu.memory_space<vmem>>, vector<128x64xf32>
    %cst_11 = arith.constant dense<0.000000e+00> : vector<8x64xf32>
    %43 = tpu.matmul %41, %42, %cst_11 {dimension_numbers = #tpu.dot_dimension_numbers<[1], [0], [0], [1], [0, 0, 1, 1], [], []>} : vector<8x128xf32>, vector<128x64xf32>, vector<8x64xf32> -> vector<8x64xf32>
    %c0_12 = arith.constant 0 : index
    %c0_13 = arith.constant 0 : index
    %44 = vector.load %arg6[%c0_12, %c0_13] : memref<1x64xf32, #tpu.memory_space<vmem>>, vector<1x64xf32>
    %45 = vector.broadcast %44 : vector<1x64xf32> to vector<8x64xf32>
    %46 = arith.addf %43, %45 : vector<8x64xf32>
    %cst_14 = arith.constant 0.000000e+00 : f32
    %47 = vector.broadcast %cst_14 : f32 to vector<8x64xf32>
    %48 = arith.maximumf %46, %47 : vector<8x64xf32>
    %49 = tpu.iota {dimensions = array<i32: 0>} : vector<8x64xi32>
    %50 = vector.broadcast %1 : i32 to vector<8x64xi32>
    %51 = arith.addi %49, %50 : vector<8x64xi32>
    %52 = tpu.iota {dimensions = array<i32: 1>} : vector<8x64xi32>
    %c-1640531527_i32_15 = arith.constant -1640531527 : i32
    %53 = vector.broadcast %c-1640531527_i32_15 : i32 to vector<8x64xi32>
    %54 = arith.muli %51, %53 : vector<8x64xi32>
    %c-2048144789_i32_16 = arith.constant -2048144789 : i32
    %55 = vector.broadcast %c-2048144789_i32_16 : i32 to vector<8x64xi32>
    %56 = arith.muli %52, %55 : vector<8x64xi32>
    %57 = arith.addi %54, %56 : vector<8x64xi32>
    %58 = vector.broadcast %0 : i32 to vector<8x64xi32>
    %59 = arith.addi %57, %58 : vector<8x64xi32>
    %c729683222_i32 = arith.constant 729683222 : i32
    %60 = vector.broadcast %c729683222_i32 : i32 to vector<8x64xi32>
    %61 = arith.addi %59, %60 : vector<8x64xi32>
    %c16_i32_17 = arith.constant 16 : i32
    %62 = vector.broadcast %c16_i32_17 : i32 to vector<8x64xi32>
    %63 = arith.shrui %61, %62 : vector<8x64xi32>
    %64 = arith.xori %61, %63 : vector<8x64xi32>
    %c2146121005_i32_18 = arith.constant 2146121005 : i32
    %65 = vector.broadcast %c2146121005_i32_18 : i32 to vector<8x64xi32>
    %66 = arith.muli %64, %65 : vector<8x64xi32>
    %c15_i32_19 = arith.constant 15 : i32
    %67 = vector.broadcast %c15_i32_19 : i32 to vector<8x64xi32>
    %68 = arith.shrui %66, %67 : vector<8x64xi32>
    %69 = arith.xori %66, %68 : vector<8x64xi32>
    %c-2073254261_i32_20 = arith.constant -2073254261 : i32
    %70 = vector.broadcast %c-2073254261_i32_20 : i32 to vector<8x64xi32>
    %71 = arith.muli %69, %70 : vector<8x64xi32>
    %c16_i32_21 = arith.constant 16 : i32
    %72 = vector.broadcast %c16_i32_21 : i32 to vector<8x64xi32>
    %73 = arith.shrui %71, %72 : vector<8x64xi32>
    %74 = arith.xori %71, %73 : vector<8x64xi32>
    %c1_i32_22 = arith.constant 1 : i32
    %75 = vector.broadcast %c1_i32_22 : i32 to vector<8x64xi32>
    %76 = arith.shrui %74, %75 : vector<8x64xi32>
    %c662579319_i32 = arith.constant 662579319 : i32
    %77 = vector.broadcast %c662579319_i32 : i32 to vector<8x64xi32>
    %78 = arith.cmpi slt, %76, %77 : vector<8x64xi32>
    %cst_23 = arith.constant 0.000000e+00 : f32
    %79 = vector.broadcast %cst_23 : f32 to vector<8x64xf32>
    %80 = arith.select %78, %48, %79 : vector<8x64xi1>, vector<8x64xf32>
    %c0_24 = arith.constant 0 : index
    %c0_25 = arith.constant 0 : index
    %81 = vector.load %arg7[%c0_24, %c0_25] : memref<64x32xf32, #tpu.memory_space<vmem>>, vector<64x32xf32>
    %cst_26 = arith.constant dense<0.000000e+00> : vector<8x32xf32>
    %82 = tpu.matmul %80, %81, %cst_26 {dimension_numbers = #tpu.dot_dimension_numbers<[1], [0], [0], [1], [0, 0, 1, 1], [], []>} : vector<8x64xf32>, vector<64x32xf32>, vector<8x32xf32> -> vector<8x32xf32>
    %c0_27 = arith.constant 0 : index
    %c0_28 = arith.constant 0 : index
    %83 = vector.load %arg8[%c0_27, %c0_28] : memref<1x32xf32, #tpu.memory_space<vmem>>, vector<1x32xf32>
    %84 = vector.broadcast %83 : vector<1x32xf32> to vector<8x32xf32>
    %85 = arith.addf %82, %84 : vector<8x32xf32>
    %c0_29 = arith.constant 0 : index
    %c0_30 = arith.constant 0 : index
    %86 = vector.load %arg9[%c0_29, %c0_30] : memref<8x32xf32, #tpu.memory_space<vmem>>, vector<8x32xf32>
    tpu.vector_store %arg9[%c0_29, %c0_30], %85 {strides = array<i32>} : memref<8x32xf32, #tpu.memory_space<vmem>>, vector<8x32xf32>,
    return
  }
  func.func @transform_0(%arg0: i32, %arg1: memref<1xi32, #tpu.memory_space<smem>>) -> (i32, i32) {
    %c0_i32 = arith.constant 0 : i32
    %c0_i32_0 = arith.constant 0 : i32
    return %arg0, %c0_i32 : i32, i32
  }
  func.func @transform_1(%arg0: i32, %arg1: memref<1xi32, #tpu.memory_space<smem>>) -> (i32, i32) {
    %c0_i32 = arith.constant 0 : i32
    %c0_i32_0 = arith.constant 0 : i32
    %c0_i32_1 = arith.constant 0 : i32
    return %c0_i32, %c0_i32_0 : i32, i32
  }
  func.func @transform_2(%arg0: i32, %arg1: memref<1xi32, #tpu.memory_space<smem>>) -> (i32, i32) {
    %c0_i32 = arith.constant 0 : i32
    %c0_i32_0 = arith.constant 0 : i32
    %c0_i32_1 = arith.constant 0 : i32
    return %c0_i32, %c0_i32_0 : i32, i32
  }
  func.func @transform_3(%arg0: i32, %arg1: memref<1xi32, #tpu.memory_space<smem>>) -> (i32, i32) {
    %c0_i32 = arith.constant 0 : i32
    %c0_i32_0 = arith.constant 0 : i32
    %c0_i32_1 = arith.constant 0 : i32
    return %c0_i32, %c0_i32_0 : i32, i32
  }
  func.func @transform_4(%arg0: i32, %arg1: memref<1xi32, #tpu.memory_space<smem>>) -> (i32, i32) {
    %c0_i32 = arith.constant 0 : i32
    %c0_i32_0 = arith.constant 0 : i32
    %c0_i32_1 = arith.constant 0 : i32
    return %c0_i32, %c0_i32_0 : i32, i32
  }
  func.func @transform_5(%arg0: i32, %arg1: memref<1xi32, #tpu.memory_space<smem>>) -> (i32, i32) {
    %c0_i32 = arith.constant 0 : i32
    %c0_i32_0 = arith.constant 0 : i32
    %c0_i32_1 = arith.constant 0 : i32
    return %c0_i32, %c0_i32_0 : i32, i32
  }
  func.func @transform_6(%arg0: i32, %arg1: memref<1xi32, #tpu.memory_space<smem>>) -> (i32, i32) {
    %c0_i32 = arith.constant 0 : i32
    %c0_i32_0 = arith.constant 0 : i32
    %c0_i32_1 = arith.constant 0 : i32
    return %c0_i32, %c0_i32_0 : i32, i32
  }
  func.func @transform_7(%arg0: i32, %arg1: memref<1xi32, #tpu.memory_space<smem>>) -> (i32, i32) {
    %c0_i32 = arith.constant 0 : i32
    %c0_i32_0 = arith.constant 0 : i32
    return %arg0, %c0_i32 : i32, i32
  }
}

</mosaic_0001>

<llo_original>
// kernel: tpu_custom_call.1
$region0: #{tpu_custom_call.1}
  #allocation0 [shape = 'u32[]', space=smem, size = 0x4, offset = 0x4, fixed_abs, tag = 'smem constant byte address 0x4 - core index']
  #allocation1 [shape = 'u32[144,128]{1,0:T(1,128)}', space=vmem, size = 0x12000, scoped, tag = 'internal scratch']
  #allocation2 [shape = 's32[1]{0}', space=sflag, size = 0x4, scoped, tag = 'scoped memory for tpu_custom_call.1']
  #allocation3 [shape = 's32[1]{0:T(128)S(6)}', space=smem, size = 0x200, scoped, tag = 'prefetched SMEM operand 0']
  %s0 = inlined_call_operand.<no memory space> [shape: s32[1], index: 0, kind: input, shape index: {}]
  %s1 = inlined_call_operand.vmem [shape: f32[2,64], index: 1, kind: input, shape index: {}]
  %s2 = inlined_call_operand.vmem [shape: f32[64,128], index: 2, kind: input, shape index: {}]
  %s3 = inlined_call_operand.vmem [shape: f32[1,128], index: 3, kind: input, shape index: {}]
  %s4 = inlined_call_operand.vmem [shape: f32[128,64], index: 4, kind: input, shape index: {}]
  %s5 = inlined_call_operand.vmem [shape: f32[1,64], index: 5, kind: input, shape index: {}]
  %s6 = inlined_call_operand.vmem [shape: f32[64,32], index: 6, kind: input, shape index: {}]
  %s7 = inlined_call_operand.vmem [shape: f32[1,32], index: 7, kind: input, shape index: {}]
  %s8 = inlined_call_operand.hbm [shape: f32[2,32], index: 8, kind: output, shape index: {}]
  %s9 = sld [smem:[#allocation0]]
  $region38: #{tpu_custom_call.1} parent=0
    _
  %s11 = ssub.s32 1, %s9
  %s12 = scalar_select 0, %s11, %s9
  %13 = sst [smem:[#allocation3]] %s0
  $region1: #{tpu_custom_call.1} parent=0
    #allocation4 [shape = 'u8[4096]{0}', space=vmem, size = 0x1000, scoped, tag = 'output window, operand 0, single buffered']
    #allocation5 [shape = 's32[1]{0}', space=sflag, size = 0x4, scoped, tag = 'scoped memory for tpu_custom_call.1']
    %14 = vsyncpa [#allocation5], 0
    // Predicated region
    $region2: #{tpu_custom_call.1} parent=1 // pred_check
      _
    $region3: #{tpu_custom_call.1} parent=1 // pred_check_branch
      %16 = sbr.rel (0) target = $region5
    $region4: #{tpu_custom_call.1} parent=1 // pred_region
      _
    $region5: #{tpu_custom_call.1} parent=1 // pred_fallthru
      _
    // Predicated region
    $region6: #{tpu_custom_call.1} parent=1 // pred_check
      _
    $region7: #{tpu_custom_call.1} parent=1 // pred_check_branch
      %18 = sbr.rel (0) target = $region9
    $region8: #{tpu_custom_call.1} parent=1 // pred_region
      _
    $region9: #{tpu_custom_call.1} parent=1 // pred_fallthru
      _
    // Predicated region
    $region10: #{tpu_custom_call.1} parent=1 // pred_check
      _
    $region11: #{tpu_custom_call.1} parent=1 // pred_check_branch
      %20 = sbr.rel (0) target = $region13
    $region12: #{tpu_custom_call.1} parent=1 // pred_region
      _
    $region13: #{tpu_custom_call.1} parent=1 // pred_fallthru
      _
    // Predicated region
    $region14: #{tpu_custom_call.1} parent=1 // pred_check
      _
    $region15: #{tpu_custom_call.1} parent=1 // pred_check_branch
      %22 = sbr.rel (0) target = $region17
    $region16: #{tpu_custom_call.1} parent=1 // pred_region
      _
    $region17: #{tpu_custom_call.1} parent=1 // pred_fallthru
      _
    // Predicated region
    $region18: #{tpu_custom_call.1} parent=1 // pred_check
      _
    $region19: #{tpu_custom_call.1} parent=1 // pred_check_branch
      %24 = sbr.rel (0) target = $region21
    $region20: #{tpu_custom_call.1} parent=1 // pred_region
      _
    $region21: #{tpu_custom_call.1} parent=1 // pred_fallthru
      _
    // Predicated region
    $region22: #{tpu_custom_call.1} parent=1 // pred_check
      _
    $region23: #{tpu_custom_call.1} parent=1 // pred_check_branch
      %26 = sbr.rel (0) target = $region25
    $region24: #{tpu_custom_call.1} parent=1 // pred_region
      _
    $region25: #{tpu_custom_call.1} parent=1 // pred_fallthru
      _
    // Predicated region
    $region26: #{tpu_custom_call.1} parent=1 // pred_check
      _
    $region27: #{tpu_custom_call.1} parent=1 // pred_check_branch
      %28 = sbr.rel (0) target = $region29
    $region28: #{tpu_custom_call.1} parent=1 // pred_region
      _
    $region29: #{tpu_custom_call.1} parent=1 // pred_fallthru
      _
    %s29 = sld [smem:[#allocation3]]
    %s30 = smul.u32 0, 8
    %v31 = vld [vmem:[%s1] sm:$0xff]
    %v32 = vld [vmem:[%s2] sm:$0xff]
    %v33 = vld [vmem:[%s2 + $0x8] sm:$0xff]
    %v34 = vld [vmem:[%s2 + $0x10] sm:$0xff]
    %v35 = vld [vmem:[%s2 + $0x18] sm:$0xff]
    %v36 = vld [vmem:[%s2 + $0x20] sm:$0xff]
    %v37 = vld [vmem:[%s2 + $0x28] sm:$0xff]
    %v38 = vld [vmem:[%s2 + $0x30] sm:$0xff]
    %v39 = vld [vmem:[%s2 + $0x38] sm:$0xff]
    %v40 = vld [vmem:[%s3] sm:$0x1]
    %v42 = vlaneseq
    %v43 = vshrl.u32 %v42, 7
    %v44 = vsub.s32 0, %v43
    %v45 = vrot.slane %v40, %v44
    %vm47 = vcmask 523264
    %v49 = vsel %vm47, %v31, 0
    %51 = vmatprep.subr.mxu0 0.0
    %52 = vmatpush1.msra.mxu0 %v32
    %53 = vmatprep.subr.mxu0 0.0
    %54 = vmatpush1.msra.mxu0 %v33
    %55 = vmatprep.subr.mxu0 0.0
    %56 = vmatpush1.msra.mxu0 %v34
    %57 = vmatprep.subr.mxu0 0.0
    %58 = vmatpush1.msra.mxu0 %v35
    %59 = vmatprep.subr.mxu0 0.0
    %60 = vmatpush1.msra.mxu0 %v36
    %61 = vmatprep.subr.mxu0 0.0
    %62 = vmatpush1.msra.mxu0 %v37
    %63 = vmatprep.subr.mxu0 0.0
    %64 = vmatpush1.msra.mxu0 %v38
    %65 = vmatprep.subr.mxu0 0.0
    %66 = vmatpush1.msra.mxu0 %v39
    %67 = vmatprep.subr.mxu0 0.0
    %68 = vmatpush1.msra.mxu0 0.0
    %69 = vmatprep.subr.mxu0 0.0
    %70 = vmatpush1.msra.mxu0 0.0
    %71 = vmatprep.subr.mxu0 0.0
    %72 = vmatpush1.msra.mxu0 0.0
    %73 = vmatprep.subr.mxu0 0.0
    %74 = vmatpush1.msra.mxu0 0.0
    %75 = vmatprep.subr.mxu0 0.0
    %76 = vmatpush1.msra.mxu0 0.0
    %77 = vmatprep.subr.mxu0 0.0
    %78 = vmatpush1.msra.mxu0 0.0
    %79 = vmatprep.subr.mxu0 0.0
    %80 = vmatpush1.msra.mxu0 0.0
    %81 = vmatprep.subr.mxu0 0.0
    %82 = vmatpush1.msra.mxu0 0.0
    %83 = vmatprep.subr.mxu0 0.0
    %84 = vmatpush1.msra.mxu0 0.0
    %85 = vmatprep.subr.mxu0 0.0
    %86 = vmatpush1.msra.mxu0 0.0
    %87 = vmatprep.subr.mxu0 0.0
    %88 = vmatpush1.msra.mxu0 0.0
    %89 = vmatprep.subr.mxu0 0.0
    %90 = vmatpush1.msra.mxu0 0.0
    %91 = vmatprep.subr.mxu0 0.0
    %92 = vmatpush1.msra.mxu0 0.0
    %93 = vmatprep.subr.mxu0 0.0
    %94 = vmatpush1.msra.mxu0 0.0
    %95 = vmatprep.subr.mxu0 0.0
    %96 = vmatpush1.msra.mxu0 0.0
    %97 = vmatprep.subr.mxu0 0.0
    %98 = vmatpush1.msra.mxu0 0.0
    %99 = vmatprep.subr.mxu0 0.0
    %100 = vmatpush1.msra.mxu0 0.0
    %101 = vmatprep.subr.mxu0 0.0
    %102 = vmatpush1.msra.mxu0 0.0
    %103 = vmatprep.subr.mxu0 0.0
    %104 = vmatpush1.msra.mxu0 0.0
    %105 = vmatprep.subr.mxu0 0.0
    %106 = vmatpush1.msra.mxu0 0.0
    %107 = vmatprep.subr.mxu0 0.0
    %108 = vmatpush1.msra.mxu0 0.0
    %109 = vmatprep.subr.mxu0 0.0
    %110 = vmatpush1.msra.mxu0 0.0
    %111 = vmatprep.subr.mxu0 0.0
    %112 = vmatpush1.msra.mxu0 0.0
    %113 = vmatprep.subr.mxu0 0.0
    %114 = vmatpush1.msra.mxu0 0.0
    %115 = vmatprep.mubr.f32.mxu0 0.0
    %116 = vmatmul.mubr.f32.gmra.mrb[0].mxu0 %v49
    %v117 = vpop.f32.mrb[0].mxu0
    %v118 = vadd.f32 %v45, %v117
    %v119 = vpop.f32.mrb[0].mxu0
    %120 = vdwg.mxu0
    %v121 = vmax.f32 %v118, 0.0
    %v122 = vlaneseq
    %v123 = vshrl.u32 %v122, 7
    %v124 = vstv %s30
    %v125 = vadd.s32 %v123, %v124
    %v126 = vlaneseq
    %v127 = vand.u32 %v126, 127
    %v128 = vmul.u32 %v125, 2654435769
    %v129 = vmul.u32 %v127, 2246822507
    %v130 = vadd.s32 %v128, %v129
    %v131 = vstv %s29
    %v132 = vadd.s32 %v130, %v131
    %v133 = vadd.s32 %v132, 608135816
    %v134 = vshrl.u32 %v133, 16
    %v135 = vxor.u32 %v133, %v134
    %v136 = vmul.u32 %v135, 2146121005
    %v137 = vshrl.u32 %v136, 15
    %v138 = vxor.u32 %v136, %v137
    %v139 = vmul.u32 %v138, 2221713035
    %v140 = vshrl.u32 %v139, 16
    %v141 = vxor.u32 %v139, %v140
    %v142 = vshrl.u32 %v141, 1
    %vm143 = vcmp.lt.s32.totalorder %v142, 903532894
    %v144 = vsel %vm143, %v121, 0.0
    %v145 = vld [vmem:[%s4] sm:$0xff]
    %v146 = vld [vmem:[%s4 + $0x8] sm:$0xff]
    %v147 = vld [vmem:[%s4 + $0x10] sm:$0xff]
    %v148 = vld [vmem:[%s4 + $0x18] sm:$0xff]
    %v149 = vld [vmem:[%s4 + $0x20] sm:$0xff]
    %v150 = vld [vmem:[%s4 + $0x28] sm:$0xff]
    %v151 = vld [vmem:[%s4 + $0x30] sm:$0xff]
    %v152 = vld [vmem:[%s4 + $0x38] sm:$0xff]
    %v153 = vld [vmem:[%s4 + $0x40] sm:$0xff]
    %v154 = vld [vmem:[%s4 + $0x48] sm:$0xff]
    %v155 = vld [vmem:[%s4 + $0x50] sm:$0xff]
    %v156 = vld [vmem:[%s4 + $0x58] sm:$0xff]
    %v157 = vld [vmem:[%s4 + $0x60] sm:$0xff]
    %v158 = vld [vmem:[%s4 + $0x68] sm:$0xff]
    %v159 = vld [vmem:[%s4 + $0x70] sm:$0xff]
    %v160 = vld [vmem:[%s4 + $0x78] sm:$0xff]
    %v161 = vld [vmem:[%s5] sm:$0x1]
    %v163 = vlaneseq
    %v164 = vshrl.u32 %v163, 7
    %v165 = vsub.s32 0, %v164
    %v166 = vrot.slane %v161, %v165
    %168 = vmatprep.subr.mxu0 0.0
    %169 = vmatpush1.msra.mxu0 %v145
    %170 = vmatprep.subr.mxu0 0.0
    %171 = vmatpush1.msra.mxu0 %v146
    %172 = vmatprep.subr.mxu0 0.0
    %173 = vmatpush1.msra.mxu0 %v147
    %174 = vmatprep.subr.mxu0 0.0
    %175 = vmatpush1.msra.mxu0 %v148
    %176 = vmatprep.subr.mxu0 0.0
    %177 = vmatpush1.msra.mxu0 %v149
    %178 = vmatprep.subr.mxu0 0.0
    %179 = vmatpush1.msra.mxu0 %v150
    %180 = vmatprep.subr.mxu0 0.0
    %181 = vmatpush1.msra.mxu0 %v151
    %182 = vmatprep.subr.mxu0 0.0
    %183 = vmatpush1.msra.mxu0 %v152
    %184 = vmatprep.subr.mxu0 0.0
    %185 = vmatpush1.msra.mxu0 %v153
    %186 = vmatprep.subr.mxu0 0.0
    %187 = vmatpush1.msra.mxu0 %v154
    %188 = vmatprep.subr.mxu0 0.0
    %189 = vmatpush1.msra.mxu0 %v155
    %190 = vmatprep.subr.mxu0 0.0
    %191 = vmatpush1.msra.mxu0 %v156
    %192 = vmatprep.subr.mxu0 0.0
    %193 = vmatpush1.msra.mxu0 %v157
    %194 = vmatprep.subr.mxu0 0.0
    %195 = vmatpush1.msra.mxu0 %v158
    %196 = vmatprep.subr.mxu0 0.0
    %197 = vmatpush1.msra.mxu0 %v159
    %198 = vmatprep.subr.mxu0 0.0
    %199 = vmatpush1.msra.mxu0 %v160
    %200 = vmatprep.subr.mxu0 0.0
    %201 = vmatpush1.msra.mxu0 0.0
    %202 = vmatprep.subr.mxu0 0.0
    %203 = vmatpush1.msra.mxu0 0.0
    %204 = vmatprep.subr.mxu0 0.0
    %205 = vmatpush1.msra.mxu0 0.0
    %206 = vmatprep.subr.mxu0 0.0
    %207 = vmatpush1.msra.mxu0 0.0
    %208 = vmatprep.subr.mxu0 0.0
    %209 = vmatpush1.msra.mxu0 0.0
    %210 = vmatprep.subr.mxu0 0.0
    %211 = vmatpush1.msra.mxu0 0.0
    %212 = vmatprep.subr.mxu0 0.0
    %213 = vmatpush1.msra.mxu0 0.0
    %214 = vmatprep.subr.mxu0 0.0
    %215 = vmatpush1.msra.mxu0 0.0
    %216 = vmatprep.subr.mxu0 0.0
    %217 = vmatpush1.msra.mxu0 0.0
    %218 = vmatprep.subr.mxu0 0.0
    %219 = vmatpush1.msra.mxu0 0.0
    %220 = vmatprep.subr.mxu0 0.0
    %221 = vmatpush1.msra.mxu0 0.0
    %222 = vmatprep.subr.mxu0 0.0
    %223 = vmatpush1.msra.mxu0 0.0
    %224 = vmatprep.subr.mxu0 0.0
    %225 = vmatpush1.msra.mxu0 0.0
    %226 = vmatprep.subr.mxu0 0.0
    %227 = vmatpush1.msra.mxu0 0.0
    %228 = vmatprep.subr.mxu0 0.0
    %229 = vmatpush1.msra.mxu0 0.0
    %230 = vmatprep.subr.mxu0 0.0
    %231 = vmatpush1.msra.mxu0 0.0
    %232 = vmatprep.mubr.f32.mxu0 0.0
    %233 = vmatmul.mubr.f32.gmra.mrb[0].mxu0 %v144
    %v234 = vpop.f32.mrb[0].mxu0
    %v235 = vadd.f32 %v166, %v234
    %v236 = vpop.f32.mrb[0].mxu0
    %237 = vdwg.mxu0
    %v238 = vmax.f32 %v235, 0.0
    %v239 = vadd.s32 %v132, 729683222
    %v240 = vshrl.u32 %v239, 16
    %v241 = vxor.u32 %v239, %v240
    %v242 = vmul.u32 %v241, 2146121005
    %v243 = vshrl.u32 %v242, 15
    %v244 = vxor.u32 %v242, %v243
    %v245 = vmul.u32 %v244, 2221713035
    %v246 = vshrl.u32 %v245, 16
    %v247 = vxor.u32 %v245, %v246
    %v248 = vshrl.u32 %v247, 1
    %vm249 = vcmp.lt.s32.totalorder %v248, 662579319
    %v250 = vsel %vm249, %v238, 0.0
    %v251 = vld [vmem:[%s6] sm:$0xff]
    %v252 = vld [vmem:[%s6 + $0x8] sm:$0xff]
    %v253 = vld [vmem:[%s6 + $0x10] sm:$0xff]
    %v254 = vld [vmem:[%s6 + $0x18] sm:$0xff]
    %v255 = vld [vmem:[%s6 + $0x20] sm:$0xff]
    %v256 = vld [vmem:[%s6 + $0x28] sm:$0xff]
    %v257 = vld [vmem:[%s6 + $0x30] sm:$0xff]
    %v258 = vld [vmem:[%s6 + $0x38] sm:$0xff]
    %v259 = vld [vmem:[%s7] sm:$0x1]
    %v261 = vlaneseq
    %v262 = vshrl.u32 %v261, 7
    %v263 = vsub.s32 0, %v262
    %v264 = vrot.slane %v259, %v263
    %v267 = vsel %vm47, %v250, 0
    %269 = vmatprep.subr.mxu0 0.0
    %270 = vmatpush1.msra.mxu0 %v251
    %271 = vmatprep.subr.mxu0 0.0
    %272 = vmatpush1.msra.mxu0 %v252
    %273 = vmatprep.subr.mxu0 0.0
    %274 = vmatpush1.msra.mxu0 %v253
    %275 = vmatprep.subr.mxu0 0.0
    %276 = vmatpush1.msra.mxu0 %v254
    %277 = vmatprep.subr.mxu0 0.0
    %278 = vmatpush1.msra.mxu0 %v255
    %279 = vmatprep.subr.mxu0 0.0
    %280 = vmatpush1.msra.mxu0 %v256
    %281 = vmatprep.subr.mxu0 0.0
    %282 = vmatpush1.msra.mxu0 %v257
    %283 = vmatprep.subr.mxu0 0.0
    %284 = vmatpush1.msra.mxu0 %v258
    %285 = vmatprep.subr.mxu0 0.0
    %286 = vmatpush1.msra.mxu0 0.0
    %287 = vmatprep.subr.mxu0 0.0
    %288 = vmatpush1.msra.mxu0 0.0
    %289 = vmatprep.subr.mxu0 0.0
    %290 = vmatpush1.msra.mxu0 0.0
    %291 = vmatprep.subr.mxu0 0.0
    %292 = vmatpush1.msra.mxu0 0.0
    %293 = vmatprep.subr.mxu0 0.0
    %294 = vmatpush1.msra.mxu0 0.0
    %295 = vmatprep.subr.mxu0 0.0
    %296 = vmatpush1.msra.mxu0 0.0
    %297 = vmatprep.subr.mxu0 0.0
    %298 = vmatpush1.msra.mxu0 0.0
    %299 = vmatprep.subr.mxu0 0.0
    %300 = vmatpush1.msra.mxu0 0.0
    %301 = vmatprep.subr.mxu0 0.0
    %302 = vmatpush1.msra.mxu0 0.0
    %303 = vmatprep.subr.mxu0 0.0
    %304 = vmatpush1.msra.mxu0 0.0
    %305 = vmatprep.subr.mxu0 0.0
    %306 = vmatpush1.msra.mxu0 0.0
    %307 = vmatprep.subr.mxu0 0.0
    %308 = vmatpush1.msra.mxu0 0.0
    %309 = vmatprep.subr.mxu0 0.0
    %310 = vmatpush1.msra.mxu0 0.0
    %311 = vmatprep.subr.mxu0 0.0
    %312 = vmatpush1.msra.mxu0 0.0
    %313 = vmatprep.subr.mxu0 0.0
    %314 = vmatpush1.msra.mxu0 0.0
    %315 = vmatprep.subr.mxu0 0.0
    %316 = vmatpush1.msra.mxu0 0.0
    %317 = vmatprep.subr.mxu0 0.0
    %318 = vmatpush1.msra.mxu0 0.0
    %319 = vmatprep.subr.mxu0 0.0
    %320 = vmatpush1.msra.mxu0 0.0
    %321 = vmatprep.subr.mxu0 0.0
    %322 = vmatpush1.msra.mxu0 0.0
    %323 = vmatprep.subr.mxu0 0.0
    %324 = vmatpush1.msra.mxu0 0.0
    %325 = vmatprep.subr.mxu0 0.0
    %326 = vmatpush1.msra.mxu0 0.0
    %327 = vmatprep.subr.mxu0 0.0
    %328 = vmatpush1.msra.mxu0 0.0
    %329 = vmatprep.subr.mxu0 0.0
    %330 = vmatpush1.msra.mxu0 0.0
    %331 = vmatprep.subr.mxu0 0.0
    %332 = vmatpush1.msra.mxu0 0.0
    %333 = vmatprep.mubr.f32.mxu0 0.0
    %334 = vmatmul.mubr.f32.gmra.mrb[0].mxu0 %v267
    %v335 = vpop.f32.mrb[0].mxu0
    %v336 = vadd.f32 %v264, %v335
    %v337 = vpop.f32.mrb[0].mxu0
    %338 = vdwg.mxu0
    %vm339 = vcmask 261120
    %340 = vst.msk [vmem:[#allocation4] sm:$0xff] %vm339, %v336
    // Predicated region
    $region30: #{tpu_custom_call.1} parent=1 // pred_check
      _
    $region31: #{tpu_custom_call.1} parent=1 // pred_check_branch
      %342 = sbr.rel (0) target = $region33
    $region32: #{tpu_custom_call.1} parent=1 // pred_region
      %s344 = ssub.s32 128, 32
      %345 = vsyncadd [#allocation5], %s344
      %s346 = sshll.u32 [#allocation4], 4
      %s347 = int_to_ptr.vmem [resolvable:$true] %s346
      %352 = dma.vmem_to_hbm [thread:$0]  %s347, 32, %s8, [#allocation5], 32, 32, 2
    $region33: #{tpu_custom_call.1} parent=1 // pred_fallthru
      _
    // Predicated region
    $region34: #{tpu_custom_call.1} parent=1 // pred_check
      _
    $region35: #{tpu_custom_call.1} parent=1 // pred_check_branch
      %354 = sbr.rel (0) target = $region37
    $region36: #{tpu_custom_call.1} parent=1 // pred_region
      %355 = dma.done [#allocation5], 128
    $region37: #{tpu_custom_call.1} parent=1 // pred_fallthru
      _
    %356 = vsyncpa [#allocation5], 1

</llo_original>
